<compile_context>
chip_gen: v7x
topology: tpu7x:2x2x1
jax: 0.10.0
libtpu: 0.0.40
codegen_flags: <defaults>
</compile_context>

<pallas_src>
import functools

import jax
import jax.numpy as jnp
import numpy as np
from jax.experimental import pallas as pl
from jax.experimental.pallas import tpu as pltpu


def _round_up(x, m):
    return (x + m - 1) // m * m


def _pad2d(a, rows, cols):
    return jnp.pad(a, ((0, rows - a.shape[0]), (0, cols - a.shape[1])))


def bmnddi_kernel(x_ref, w1_ref, w2_ref, wc1_ref, wc2_ref, b_ref, out_ref):
    """Fused BMNDDI forward for one batch tile (everything resident in VMEM).

    x_ref holds this tile's drugs_a rows stacked on top of drugs_b rows
    (2*tb, in_dim), so the shared feature extractor runs as one matmul pass.
    """
    tb = out_ref.shape[0]                   # rows per drug in this tile
    hid_p = w1_ref.shape[1]
    feat_p = w2_ref.shape[1]
    ch_p = wc1_ref.shape[1]
    out_dim = wc2_ref.shape[1]
    md = w1_ref.dtype                       # matmul operand dtype (bf16 or f32)

    # Fused bias slab: row 0 = b1, 1 = b2, 2 = bc1, 3 = bc2 (all f32).
    b1 = b_ref[0:1, :hid_p]
    b2 = b_ref[1:2, :feat_p]
    bc1 = b_ref[2:3, :ch_p]
    bc2 = b_ref[3:4, :out_dim]

    # Shared feature extractor, ONE pass over both drugs (stacked on sublanes).
    x = x_ref[...]                                               # (2*tb, in_dim)
    h = jnp.dot(x, w1_ref[...], preferred_element_type=jnp.float32) + b1
    h = jnp.maximum(h, 0.0).astype(md)
    f = jnp.dot(h, w2_ref[...], preferred_element_type=jnp.float32) + b2
    f = jnp.maximum(f, 0.0).astype(md)                           # (2*tb, feat_p)

    f1 = f[:tb, :]
    f2 = f[tb:, :]

    # Classifier layer 1 on concat([f1, f2], axis=1), as a split matmul.
    g = (jnp.dot(f1, wc1_ref[:feat_p, :], preferred_element_type=jnp.float32)
         + jnp.dot(f2, wc1_ref[feat_p:, :], preferred_element_type=jnp.float32)
         + bc1)
    g = jnp.maximum(g, 0.0).astype(md)

    # Classifier output layer + Sigmoid (f32 elementwise, true output width).
    logits = jnp.dot(g, wc2_ref[...], preferred_element_type=jnp.float32) + bc2
    out_ref[...] = jax.nn.sigmoid(logits)


def bmnddi_forward(drugs_a, drugs_b, params, *, tb=None,
                   matmul_dtype=jnp.bfloat16):
    w1, b1, w2, b2, wc1, bc1, wc2, bc2 = params
    B, in_dim = drugs_a.shape
    hidden = w1.shape[1]
    feat = w2.shape[1]
    c_hidden = wc1.shape[1]
    out_dim = wc2.shape[1]

    LANE = 128
    hid_p = _round_up(hidden, LANE)
    feat_p = _round_up(feat, LANE)
    ch_p = _round_up(c_hidden, LANE)

    # Batch tile: big tiles (fewer fixed-overhead grid steps, full MXU M dim),
    # but split the batch into >=2 steps when possible so both v7x TensorCores
    # get a share of the "parallel" axis.  Cap at 1024 rows/step.
    if tb is None:
        tb = min(1024, max(_round_up((B + 1) // 2, 16), 16))
    tb = _round_up(tb, 16)          # multiple of 16 -> aligned for bf16 packing
    B_pad = _round_up(B, tb)
    num_tiles = B_pad // tb

    md = matmul_dtype

    # Drug inputs: cast only (no lane padding!), pad batch to a tile multiple,
    # and pre-stack per tile so each grid step reads one contiguous
    # (2*tb, in_dim) block: rows [a_tile ; b_tile].
    da = jnp.pad(drugs_a.astype(md), ((0, B_pad - B), (0, 0)))
    db = jnp.pad(drugs_b.astype(md), ((0, B_pad - B), (0, 0)))
    x = jnp.concatenate([da.reshape(num_tiles, tb, in_dim),
                         db.reshape(num_tiles, tb, in_dim)], axis=1)
    x = x.reshape(num_tiles * 2 * tb, in_dim)

    # Weights: lane dims padded to 128 (MXU-friendly), K dims kept true size.
    w1p = _pad2d(w1.astype(md), in_dim, hid_p)
    w2p = _pad2d(w2.astype(md), hid_p, feat_p)
    # Split classifier layer-1 weight for the two concatenated halves, pad
    # each, and re-stack into a single array (kernel slices it at feat_p).
    wc1a = _pad2d(wc1[:feat, :].astype(md), feat_p, ch_p)
    wc1b = _pad2d(wc1[feat:, :].astype(md), feat_p, ch_p)
    wc1p = jnp.concatenate([wc1a, wc1b], axis=0)                 # (2*feat_p, ch_p)
    wc2p = _pad2d(wc2.astype(md), ch_p, out_dim)                 # true out width

    # Fuse the four bias vectors into one (4, bmax) f32 slab.
    bmax = max(hid_p, feat_p, ch_p, out_dim)

    def padb(b):
        b = jnp.asarray(b, jnp.float32).reshape(1, -1)
        return jnp.pad(b, ((0, 0), (0, bmax - b.shape[1])))

    b_all = jnp.concatenate([padb(b1), padb(b2), padb(bc1), padb(bc2)], axis=0)

    # Constant-index weight/bias blocks (resident across grid steps).
    full = lambda a: pl.BlockSpec(a.shape, lambda i: (0,) * a.ndim)

    out = pl.pallas_call(
        bmnddi_kernel,
        out_shape=jax.ShapeDtypeStruct((B_pad, out_dim), jnp.float32),
        grid_spec=pltpu.PrefetchScalarGridSpec(
            num_scalar_prefetch=0,
            grid=(num_tiles,),
            in_specs=[
                pl.BlockSpec((2 * tb, in_dim), lambda i: (i, 0)),  # stacked a;b
                full(w1p), full(w2p), full(wc1p), full(wc2p), full(b_all),
            ],
            out_specs=pl.BlockSpec((tb, out_dim), lambda i: (i, 0)),
        ),
        compiler_params=pltpu.CompilerParams(
            dimension_semantics=("parallel",)),
    )(x, w1p, w2p, wc1p, wc2p, b_all)

    return out[:B, :]


def bmnddi_reference(drugs_a, drugs_b, params):
    """Pure-JAX reference mirroring the PyTorch forward (mode='concat')."""
    w1, b1, w2, b2, wc1, bc1, wc2, bc2 = params

    def fe(x):
        h = jnp.maximum(x @ w1 + b1, 0.0)
        return jnp.maximum(h @ w2 + b2, 0.0)

    f1 = fe(drugs_a)
    f2 = fe(drugs_b)
    ddi = jnp.concatenate([f1, f2], axis=1)
    h = jnp.maximum(ddi @ wc1 + bc1, 0.0)
    return jax.nn.sigmoid(h @ wc2 + bc2)


def make_params(key, in_dim, hidden, feat, c_hidden, out_dim):
    ks = jax.random.split(key, 8)
    scale = 0.1
    w1 = scale * jax.random.normal(ks[0], (in_dim, hidden), jnp.float32)
    b1 = scale * jax.random.normal(ks[1], (1, hidden), jnp.float32)
    w2 = scale * jax.random.normal(ks[2], (hidden, feat), jnp.float32)
    b2 = scale * jax.random.normal(ks[3], (1, feat), jnp.float32)
    wc1 = scale * jax.random.normal(ks[4], (2 * feat, c_hidden), jnp.float32)
    bc1 = scale * jax.random.normal(ks[5], (1, c_hidden), jnp.float32)
    wc2 = scale * jax.random.normal(ks[6], (c_hidden, out_dim), jnp.float32)
    bc2 = scale * jax.random.normal(ks[7], (1, out_dim), jnp.float32)
    return (w1, b1, w2, b2, wc1, bc1, wc2, bc2)


if __name__ == "__main__":
    # Small shapes consistent with the module's forward:
    #   batch=16, drug input dim=32, FE hidden=64, FE output=32,
    #   classifier hidden=64, output_dim=16.
    B, IN_DIM, HIDDEN, FEAT, C_HIDDEN, OUT_DIM = 16, 32, 64, 32, 64, 16

    key = jax.random.PRNGKey(0)
    k_a, k_b, k_p = jax.random.split(key, 3)
    drugs_a = jax.random.normal(k_a, (B, IN_DIM), jnp.float32)
    drugs_b = jax.random.normal(k_b, (B, IN_DIM), jnp.float32)
    params = make_params(k_p, IN_DIM, HIDDEN, FEAT, C_HIDDEN, OUT_DIM)

    ref = bmnddi_reference(drugs_a, drugs_b, params)

    # jit both paths so wrapper-side cast/pad/stack fuse with the kernel call.
    fwd_f32 = jax.jit(functools.partial(bmnddi_forward,
                                        matmul_dtype=jnp.float32))
    fwd_bf16 = jax.jit(functools.partial(bmnddi_forward,
                                         matmul_dtype=jnp.bfloat16))

    # f32 matmul-operand path (bit-exact vs. the f32 reference).
    out_f32 = jax.block_until_ready(fwd_f32(drugs_a, drugs_b, params))
    np.testing.assert_allclose(np.asarray(out_f32), np.asarray(ref),
                               rtol=1e-5, atol=1e-5)

    # bf16 matmul-operand path (default; MXU fast path on all gens,
    # f32 accumulation + f32 bias/ReLU/sigmoid).
    out_bf16 = jax.block_until_ready(fwd_bf16(drugs_a, drugs_b, params))
    np.testing.assert_allclose(np.asarray(out_bf16), np.asarray(ref),
                               rtol=0, atol=3e-2)

    # TODO(synk): graph_net (DGINConv), aux feature net, co-attention, and the
    # SelfAttentionLayer classifier head are optional branches not exercised in
    # the base 'concat' configuration and are not implemented here.
    print("KERNEL_OK")
</pallas_src>

<mosaic_0001>
module attributes {stable_mosaic.version = 11 : i64} {
  func.func @bmnddi_kernel(%arg0: i32, %arg1: memref<32x32xf32, #tpu.memory_space<vmem>>, %arg2: memref<32x128xf32, #tpu.memory_space<vmem>>, %arg3: memref<128x128xf32, #tpu.memory_space<vmem>>, %arg4: memref<256x128xf32, #tpu.memory_space<vmem>>, %arg5: memref<128x16xf32, #tpu.memory_space<vmem>>, %arg6: memref<4x128xf32, #tpu.memory_space<vmem>>, %arg7: memref<16x16xf32, #tpu.memory_space<vmem>>) attributes {dimension_semantics = [#tpu.dimension_semantics<parallel>], iteration_bounds = array<i64: 1>, scalar_prefetch = 0 : i64, scratch_operands = 0 : i64, tpu.core_type = #tpu.core_type<tc>, window_params = [{transform_indices = @transform_0, window_bounds = array<i64: 32, 32>}, {pipeline_mode = #tpu.pipeline_mode<synchronous>, transform_indices = @transform_1, window_bounds = array<i64: 32, 128>}, {pipeline_mode = #tpu.pipeline_mode<synchronous>, transform_indices = @transform_2, window_bounds = array<i64: 128, 128>}, {pipeline_mode = #tpu.pipeline_mode<synchronous>, transform_indices = @transform_3, window_bounds = array<i64: 256, 128>}, {pipeline_mode = #tpu.pipeline_mode<synchronous>, transform_indices = @transform_4, window_bounds = array<i64: 128, 16>}, {pipeline_mode = #tpu.pipeline_mode<synchronous>, transform_indices = @transform_5, window_bounds = array<i64: 4, 128>}, {transform_indices = @transform_6, window_bounds = array<i64: 16, 16>}]} {
    %c0 = arith.constant 0 : index
    %c0_0 = arith.constant 0 : index
    %0 = vector.load %arg6[%c0, %c0_0] : memref<4x128xf32, #tpu.memory_space<vmem>>, vector<1x128xf32>
    %c1 = arith.constant 1 : index
    %c0_1 = arith.constant 0 : index
    %1 = vector.load %arg6[%c1, %c0_1] : memref<4x128xf32, #tpu.memory_space<vmem>>, vector<1x128xf32>
    %c2 = arith.constant 2 : index
    %c0_2 = arith.constant 0 : index
    %2 = vector.load %arg6[%c2, %c0_2] : memref<4x128xf32, #tpu.memory_space<vmem>>, vector<1x128xf32>
    %c3 = arith.constant 3 : index
    %c0_3 = arith.constant 0 : index
    %3 = vector.load %arg6[%c3, %c0_3] : memref<4x128xf32, #tpu.memory_space<vmem>>, vector<1x16xf32>
    %c0_4 = arith.constant 0 : index
    %c0_5 = arith.constant 0 : index
    %4 = vector.load %arg1[%c0_4, %c0_5] : memref<32x32xf32, #tpu.memory_space<vmem>>, vector<32x32xf32>
    %c0_6 = arith.constant 0 : index
    %c0_7 = arith.constant 0 : index
    %5 = vector.load %arg2[%c0_6, %c0_7] : memref<32x128xf32, #tpu.memory_space<vmem>>, vector<32x128xf32>
    %cst = arith.constant dense<0.000000e+00> : vector<32x128xf32>
    %6 = tpu.matmul %4, %5, %cst {dimension_numbers = #tpu.dot_dimension_numbers<[1], [0], [0], [1], [0, 0, 1, 1], [], []>} : vector<32x32xf32>, vector<32x128xf32>, vector<32x128xf32> -> vector<32x128xf32>
    %7 = vector.broadcast %0 : vector<1x128xf32> to vector<32x128xf32>
    %8 = arith.addf %6, %7 : vector<32x128xf32>
    %cst_8 = arith.constant 0.000000e+00 : f32
    %9 = vector.broadcast %cst_8 : f32 to vector<32x128xf32>
    %10 = arith.maximumf %8, %9 : vector<32x128xf32>
    %c0_9 = arith.constant 0 : index
    %c0_10 = arith.constant 0 : index
    %11 = vector.load %arg3[%c0_9, %c0_10] : memref<128x128xf32, #tpu.memory_space<vmem>>, vector<128x128xf32>
    %cst_11 = arith.constant dense<0.000000e+00> : vector<32x128xf32>
    %12 = tpu.matmul %10, %11, %cst_11 {dimension_numbers = #tpu.dot_dimension_numbers<[1], [0], [0], [1], [0, 0, 1, 1], [], []>} : vector<32x128xf32>, vector<128x128xf32>, vector<32x128xf32> -> vector<32x128xf32>
    %13 = vector.broadcast %1 : vector<1x128xf32> to vector<32x128xf32>
    %14 = arith.addf %12, %13 : vector<32x128xf32>
    %cst_12 = arith.constant 0.000000e+00 : f32
    %15 = vector.broadcast %cst_12 : f32 to vector<32x128xf32>
    %16 = arith.maximumf %14, %15 : vector<32x128xf32>
    %17 = vector.extract_strided_slice %16 {offsets = [0, 0], sizes = [16, 128], strides = [1, 1]} : vector<32x128xf32> to vector<16x128xf32>
    %18 = vector.extract_strided_slice %16 {offsets = [16, 0], sizes = [16, 128], strides = [1, 1]} : vector<32x128xf32> to vector<16x128xf32>
    %c0_13 = arith.constant 0 : index
    %c0_14 = arith.constant 0 : index
    %19 = vector.load %arg4[%c0_13, %c0_14] : memref<256x128xf32, #tpu.memory_space<vmem>>, vector<128x128xf32>
    %cst_15 = arith.constant dense<0.000000e+00> : vector<16x128xf32>
    %20 = tpu.matmul %17, %19, %cst_15 {dimension_numbers = #tpu.dot_dimension_numbers<[1], [0], [0], [1], [0, 0, 1, 1], [], []>} : vector<16x128xf32>, vector<128x128xf32>, vector<16x128xf32> -> vector<16x128xf32>
    %c128 = arith.constant 128 : index
    %c0_16 = arith.constant 0 : index
    %21 = vector.load %arg4[%c128, %c0_16] : memref<256x128xf32, #tpu.memory_space<vmem>>, vector<128x128xf32>
    %cst_17 = arith.constant dense<0.000000e+00> : vector<16x128xf32>
    %22 = tpu.matmul %18, %21, %cst_17 {dimension_numbers = #tpu.dot_dimension_numbers<[1], [0], [0], [1], [0, 0, 1, 1], [], []>} : vector<16x128xf32>, vector<128x128xf32>, vector<16x128xf32> -> vector<16x128xf32>
    %23 = arith.addf %20, %22 : vector<16x128xf32>
    %24 = vector.broadcast %2 : vector<1x128xf32> to vector<16x128xf32>
    %25 = arith.addf %23, %24 : vector<16x128xf32>
    %cst_18 = arith.constant 0.000000e+00 : f32
    %26 = vector.broadcast %cst_18 : f32 to vector<16x128xf32>
    %27 = arith.maximumf %25, %26 : vector<16x128xf32>
    %c0_19 = arith.constant 0 : index
    %c0_20 = arith.constant 0 : index
    %28 = vector.load %arg5[%c0_19, %c0_20] : memref<128x16xf32, #tpu.memory_space<vmem>>, vector<128x16xf32>
    %cst_21 = arith.constant dense<0.000000e+00> : vector<16x16xf32>
    %29 = tpu.matmul %27, %28, %cst_21 {dimension_numbers = #tpu.dot_dimension_numbers<[1], [0], [0], [1], [0, 0, 1, 1], [], []>} : vector<16x128xf32>, vector<128x16xf32>, vector<16x16xf32> -> vector<16x16xf32>
    %30 = vector.broadcast %3 : vector<1x16xf32> to vector<16x16xf32>
    %31 = arith.addf %29, %30 : vector<16x16xf32>
    %32 = arith.negf %31 : vector<16x16xf32>
    %33 = math.exp %32 : vector<16x16xf32>
    %cst_22 = arith.constant 1.000000e+00 : f32
    %34 = vector.broadcast %cst_22 : f32 to vector<16x16xf32>
    %35 = arith.addf %34, %33 : vector<16x16xf32>
    %36 = arith.divf %34, %35 : vector<16x16xf32>
    %c0_23 = arith.constant 0 : index
    %c0_24 = arith.constant 0 : index
    %37 = vector.load %arg7[%c0_23, %c0_24] : memref<16x16xf32, #tpu.memory_space<vmem>>, vector<16x16xf32>
    tpu.vector_store %arg7[%c0_23, %c0_24], %36 {strides = array<i32>} : memref<16x16xf32, #tpu.memory_space<vmem>>, vector<16x16xf32>,
    return
  }
  func.func @transform_0(%arg0: i32) -> (i32, i32) {
    %c0_i32 = arith.constant 0 : i32
    %c0_i32_0 = arith.constant 0 : i32
    return %arg0, %c0_i32 : i32, i32
  }
  func.func @transform_1(%arg0: i32) -> (i32, i32) {
    %c0_i32 = arith.constant 0 : i32
    %c0_i32_0 = arith.constant 0 : i32
    %c0_i32_1 = arith.constant 0 : i32
    return %c0_i32, %c0_i32_0 : i32, i32
  }
  func.func @transform_2(%arg0: i32) -> (i32, i32) {
    %c0_i32 = arith.constant 0 : i32
    %c0_i32_0 = arith.constant 0 : i32
    %c0_i32_1 = arith.constant 0 : i32
    return %c0_i32, %c0_i32_0 : i32, i32
  }
  func.func @transform_3(%arg0: i32) -> (i32, i32) {
    %c0_i32 = arith.constant 0 : i32
    %c0_i32_0 = arith.constant 0 : i32
    %c0_i32_1 = arith.constant 0 : i32
    return %c0_i32, %c0_i32_0 : i32, i32
  }
  func.func @transform_4(%arg0: i32) -> (i32, i32) {
    %c0_i32 = arith.constant 0 : i32
    %c0_i32_0 = arith.constant 0 : i32
    %c0_i32_1 = arith.constant 0 : i32
    return %c0_i32, %c0_i32_0 : i32, i32
  }
  func.func @transform_5(%arg0: i32) -> (i32, i32) {
    %c0_i32 = arith.constant 0 : i32
    %c0_i32_0 = arith.constant 0 : i32
    %c0_i32_1 = arith.constant 0 : i32
    return %c0_i32, %c0_i32_0 : i32, i32
  }
  func.func @transform_6(%arg0: i32) -> (i32, i32) {
    %c0_i32 = arith.constant 0 : i32
    %c0_i32_0 = arith.constant 0 : i32
    return %arg0, %c0_i32 : i32, i32
  }
}

</mosaic_0001>

<llo_original>
// kernel: bmnddi_forward.1
$region0: #{bmnddi_forward.1}
  #allocation0 [shape = 'u32[]', space=smem, size = 0x4, offset = 0x4, fixed_abs, tag = 'smem constant byte address 0x4 - core index']
  #allocation1 [shape = 'u32[144,128]{1,0:T(1,128)}', space=vmem, size = 0x12000, scoped, tag = 'internal scratch']
  %s0 = inlined_call_operand.vmem [shape: f32[32,32], index: 0, kind: input, shape index: {}]
  %s1 = inlined_call_operand.vmem [shape: f32[32,128], index: 1, kind: input, shape index: {}]
  %s2 = inlined_call_operand.vmem [shape: f32[128,128], index: 2, kind: input, shape index: {}]
  %s3 = inlined_call_operand.vmem [shape: f32[256,128], index: 3, kind: input, shape index: {}]
  %s4 = inlined_call_operand.vmem [shape: f32[128,16], index: 4, kind: input, shape index: {}]
  %s5 = inlined_call_operand.vmem [shape: f32[4,128], index: 5, kind: input, shape index: {}]
  %s6 = inlined_call_operand.hbm [shape: f32[16,16], index: 6, kind: output, shape index: {}]
  %s7 = sld [smem:[#allocation0]]
  $region34: #{bmnddi_forward.1} parent=0
    _
  %s9 = ssub.s32 1, %s7
  %s10 = scalar_select 0, %s9, %s7
  $region1: #{bmnddi_forward.1} parent=0
    #allocation2 [shape = 'u8[8192]{0}', space=vmem, size = 0x2000, scoped, tag = 'output window, operand 0, single buffered']
    #allocation3 [shape = 's32[1]{0}', space=sflag, size = 0x4, scoped, tag = 'scoped memory for bmnddi_forward.1']
    %11 = vsyncpa [#allocation3], 0
    // Predicated region
    $region2: #{bmnddi_forward.1} parent=1 // pred_check
      _
    $region3: #{bmnddi_forward.1} parent=1 // pred_check_branch
      %13 = sbr.rel (0) target = $region5
    $region4: #{bmnddi_forward.1} parent=1 // pred_region
      _
    $region5: #{bmnddi_forward.1} parent=1 // pred_fallthru
      _
    // Predicated region
    $region6: #{bmnddi_forward.1} parent=1 // pred_check
      _
    $region7: #{bmnddi_forward.1} parent=1 // pred_check_branch
      %15 = sbr.rel (0) target = $region9
    $region8: #{bmnddi_forward.1} parent=1 // pred_region
      _
    $region9: #{bmnddi_forward.1} parent=1 // pred_fallthru
      _
    // Predicated region
    $region10: #{bmnddi_forward.1} parent=1 // pred_check
      _
    $region11: #{bmnddi_forward.1} parent=1 // pred_check_branch
      %17 = sbr.rel (0) target = $region13
    $region12: #{bmnddi_forward.1} parent=1 // pred_region
      _
    $region13: #{bmnddi_forward.1} parent=1 // pred_fallthru
      _
    // Predicated region
    $region14: #{bmnddi_forward.1} parent=1 // pred_check
      _
    $region15: #{bmnddi_forward.1} parent=1 // pred_check_branch
      %19 = sbr.rel (0) target = $region17
    $region16: #{bmnddi_forward.1} parent=1 // pred_region
      _
    $region17: #{bmnddi_forward.1} parent=1 // pred_fallthru
      _
    // Predicated region
    $region18: #{bmnddi_forward.1} parent=1 // pred_check
      _
    $region19: #{bmnddi_forward.1} parent=1 // pred_check_branch
      %21 = sbr.rel (0) target = $region21
    $region20: #{bmnddi_forward.1} parent=1 // pred_region
      _
    $region21: #{bmnddi_forward.1} parent=1 // pred_fallthru
      _
    // Predicated region
    $region22: #{bmnddi_forward.1} parent=1 // pred_check
      _
    $region23: #{bmnddi_forward.1} parent=1 // pred_check_branch
      %23 = sbr.rel (0) target = $region25
    $region24: #{bmnddi_forward.1} parent=1 // pred_region
      _
    $region25: #{bmnddi_forward.1} parent=1 // pred_fallthru
      _
    %v24 = vld [vmem:[%s5] sm:$0x1]
    %v25 = vld [vmem:[%s5 + $0x1] sm:$0x1]
    %v26 = vld [vmem:[%s5 + $0x2] sm:$0x1]
    %v27 = vld [vmem:[%s5 + $0x3] sm:$0x1]
    %v28 = vld [vmem:[%s0] sm:$0xff]
    %v29 = vld [vmem:[%s0 + $0x8] sm:$0xff]
    %v30 = vld [vmem:[%s0 + $0x10] sm:$0xff]
    %v31 = vld [vmem:[%s0 + $0x18] sm:$0xff]
    %v32 = vld [vmem:[%s1] sm:$0xff]
    %v33 = vld [vmem:[%s1 + $0x8] sm:$0xff]
    %v34 = vld [vmem:[%s1 + $0x10] sm:$0xff]
    %v35 = vld [vmem:[%s1 + $0x18] sm:$0xff]
    %v36 = vlaneseq
    %v37 = vshrl.u32 %v36, 7
    %v38 = vsub.s32 0, %v37
    %v39 = vrot.slane %v24, %v38
    %vm40 = vcmask 261120
    %v42 = vsel %vm40, %v28, 0
    %v45 = vsel %vm40, %v29, 0
    %v48 = vsel %vm40, %v30, 0
    %v51 = vsel %vm40, %v31, 0
    %53 = vmatprep.subr.mxu0 0.0
    %54 = vmatpush1.msra.mxu0 %v32
    %55 = vmatprep.subr.mxu0 0.0
    %56 = vmatpush1.msra.mxu0 %v33
    %57 = vmatprep.subr.mxu0 0.0
    %58 = vmatpush1.msra.mxu0 %v34
    %59 = vmatprep.subr.mxu0 0.0
    %60 = vmatpush1.msra.mxu0 %v35
    %61 = vmatprep.subr.mxu0 0.0
    %62 = vmatpush1.msra.mxu0 0.0
    %63 = vmatprep.subr.mxu0 0.0
    %64 = vmatpush1.msra.mxu0 0.0
    %65 = vmatprep.subr.mxu0 0.0
    %66 = vmatpush1.msra.mxu0 0.0
    %67 = vmatprep.subr.mxu0 0.0
    %68 = vmatpush1.msra.mxu0 0.0
    %69 = vmatprep.subr.mxu0 0.0
    %70 = vmatpush1.msra.mxu0 0.0
    %71 = vmatprep.subr.mxu0 0.0
    %72 = vmatpush1.msra.mxu0 0.0
    %73 = vmatprep.subr.mxu0 0.0
    %74 = vmatpush1.msra.mxu0 0.0
    %75 = vmatprep.subr.mxu0 0.0
    %76 = vmatpush1.msra.mxu0 0.0
    %77 = vmatprep.subr.mxu0 0.0
    %78 = vmatpush1.msra.mxu0 0.0
    %79 = vmatprep.subr.mxu0 0.0
    %80 = vmatpush1.msra.mxu0 0.0
    %81 = vmatprep.subr.mxu0 0.0
    %82 = vmatpush1.msra.mxu0 0.0
    %83 = vmatprep.subr.mxu0 0.0
    %84 = vmatpush1.msra.mxu0 0.0
    %85 = vmatprep.subr.mxu0 0.0
    %86 = vmatpush1.msra.mxu0 0.0
    %87 = vmatprep.subr.mxu0 0.0
    %88 = vmatpush1.msra.mxu0 0.0
    %89 = vmatprep.subr.mxu0 0.0
    %90 = vmatpush1.msra.mxu0 0.0
    %91 = vmatprep.subr.mxu0 0.0
    %92 = vmatpush1.msra.mxu0 0.0
    %93 = vmatprep.subr.mxu0 0.0
    %94 = vmatpush1.msra.mxu0 0.0
    %95 = vmatprep.subr.mxu0 0.0
    %96 = vmatpush1.msra.mxu0 0.0
    %97 = vmatprep.subr.mxu0 0.0
    %98 = vmatpush1.msra.mxu0 0.0
    %99 = vmatprep.subr.mxu0 0.0
    %100 = vmatpush1.msra.mxu0 0.0
    %101 = vmatprep.subr.mxu0 0.0
    %102 = vmatpush1.msra.mxu0 0.0
    %103 = vmatprep.subr.mxu0 0.0
    %104 = vmatpush1.msra.mxu0 0.0
    %105 = vmatprep.subr.mxu0 0.0
    %106 = vmatpush1.msra.mxu0 0.0
    %107 = vmatprep.subr.mxu0 0.0
    %108 = vmatpush1.msra.mxu0 0.0
    %109 = vmatprep.subr.mxu0 0.0
    %110 = vmatpush1.msra.mxu0 0.0
    %111 = vmatprep.subr.mxu0 0.0
    %112 = vmatpush1.msra.mxu0 0.0
    %113 = vmatprep.subr.mxu0 0.0
    %114 = vmatpush1.msra.mxu0 0.0
    %115 = vmatprep.subr.mxu0 0.0
    %116 = vmatpush1.msra.mxu0 0.0
    %117 = vmatprep.mubr.f32.mxu0 0.0
    %118 = vmatmul.mubr.f32.gmra.mrb[0].mxu0 %v42
    %v119 = vpop.f32.mrb[0].mxu0
    %v120 = vadd.f32 %v39, %v119
    %v121 = vpop.f32.mrb[0].mxu0
    %122 = vmatprep.mubr.f32.mxu0 0.0
    %123 = vmatmul.mubr.f32.gmra.mrb[0].mxu0 %v45
    %v124 = vpop.f32.mrb[0].mxu0
    %v125 = vadd.f32 %v39, %v124
    %v126 = vpop.f32.mrb[0].mxu0
    %127 = vmatprep.mubr.f32.mxu0 0.0
    %128 = vmatmul.mubr.f32.gmra.mrb[0].mxu0 %v48
    %v129 = vpop.f32.mrb[0].mxu0
    %v130 = vadd.f32 %v39, %v129
    %v131 = vpop.f32.mrb[0].mxu0
    %132 = vmatprep.mubr.f32.mxu0 0.0
    %133 = vmatmul.mubr.f32.gmra.mrb[0].mxu0 %v51
    %v134 = vpop.f32.mrb[0].mxu0
    %v135 = vadd.f32 %v39, %v134
    %v136 = vpop.f32.mrb[0].mxu0
    %137 = vdwg.mxu0
    %v138 = vmax.f32 %v120, 0.0
    %v139 = vmax.f32 %v125, 0.0
    %v140 = vmax.f32 %v130, 0.0
    %v141 = vmax.f32 %v135, 0.0
    %v142 = vld [vmem:[%s2] sm:$0xff]
    %v143 = vld [vmem:[%s2 + $0x8] sm:$0xff]
    %v144 = vld [vmem:[%s2 + $0x10] sm:$0xff]
    %v145 = vld [vmem:[%s2 + $0x18] sm:$0xff]
    %v146 = vld [vmem:[%s2 + $0x20] sm:$0xff]
    %v147 = vld [vmem:[%s2 + $0x28] sm:$0xff]
    %v148 = vld [vmem:[%s2 + $0x30] sm:$0xff]
    %v149 = vld [vmem:[%s2 + $0x38] sm:$0xff]
    %v150 = vld [vmem:[%s2 + $0x40] sm:$0xff]
    %v151 = vld [vmem:[%s2 + $0x48] sm:$0xff]
    %v152 = vld [vmem:[%s2 + $0x50] sm:$0xff]
    %v153 = vld [vmem:[%s2 + $0x58] sm:$0xff]
    %v154 = vld [vmem:[%s2 + $0x60] sm:$0xff]
    %v155 = vld [vmem:[%s2 + $0x68] sm:$0xff]
    %v156 = vld [vmem:[%s2 + $0x70] sm:$0xff]
    %v157 = vld [vmem:[%s2 + $0x78] sm:$0xff]
    %v158 = vlaneseq
    %v159 = vshrl.u32 %v158, 7
    %v160 = vsub.s32 0, %v159
    %v161 = vrot.slane %v25, %v160
    %162 = vmatprep.subr.mxu0 0.0
    %163 = vmatpush1.msra.mxu0 %v142
    %164 = vmatprep.subr.mxu0 0.0
    %165 = vmatpush1.msra.mxu0 %v143
    %166 = vmatprep.subr.mxu0 0.0
    %167 = vmatpush1.msra.mxu0 %v144
    %168 = vmatprep.subr.mxu0 0.0
    %169 = vmatpush1.msra.mxu0 %v145
    %170 = vmatprep.subr.mxu0 0.0
    %171 = vmatpush1.msra.mxu0 %v146
    %172 = vmatprep.subr.mxu0 0.0
    %173 = vmatpush1.msra.mxu0 %v147
    %174 = vmatprep.subr.mxu0 0.0
    %175 = vmatpush1.msra.mxu0 %v148
    %176 = vmatprep.subr.mxu0 0.0
    %177 = vmatpush1.msra.mxu0 %v149
    %178 = vmatprep.subr.mxu0 0.0
    %179 = vmatpush1.msra.mxu0 %v150
    %180 = vmatprep.subr.mxu0 0.0
    %181 = vmatpush1.msra.mxu0 %v151
    %182 = vmatprep.subr.mxu0 0.0
    %183 = vmatpush1.msra.mxu0 %v152
    %184 = vmatprep.subr.mxu0 0.0
    %185 = vmatpush1.msra.mxu0 %v153
    %186 = vmatprep.subr.mxu0 0.0
    %187 = vmatpush1.msra.mxu0 %v154
    %188 = vmatprep.subr.mxu0 0.0
    %189 = vmatpush1.msra.mxu0 %v155
    %190 = vmatprep.subr.mxu0 0.0
    %191 = vmatpush1.msra.mxu0 %v156
    %192 = vmatprep.subr.mxu0 0.0
    %193 = vmatpush1.msra.mxu0 %v157
    %194 = vmatprep.subr.mxu0 0.0
    %195 = vmatpush1.msra.mxu0 0.0
    %196 = vmatprep.subr.mxu0 0.0
    %197 = vmatpush1.msra.mxu0 0.0
    %198 = vmatprep.subr.mxu0 0.0
    %199 = vmatpush1.msra.mxu0 0.0
    %200 = vmatprep.subr.mxu0 0.0
    %201 = vmatpush1.msra.mxu0 0.0
    %202 = vmatprep.subr.mxu0 0.0
    %203 = vmatpush1.msra.mxu0 0.0
    %204 = vmatprep.subr.mxu0 0.0
    %205 = vmatpush1.msra.mxu0 0.0
    %206 = vmatprep.subr.mxu0 0.0
    %207 = vmatpush1.msra.mxu0 0.0
    %208 = vmatprep.subr.mxu0 0.0
    %209 = vmatpush1.msra.mxu0 0.0
    %210 = vmatprep.subr.mxu0 0.0
    %211 = vmatpush1.msra.mxu0 0.0
    %212 = vmatprep.subr.mxu0 0.0
    %213 = vmatpush1.msra.mxu0 0.0
    %214 = vmatprep.subr.mxu0 0.0
    %215 = vmatpush1.msra.mxu0 0.0
    %216 = vmatprep.subr.mxu0 0.0
    %217 = vmatpush1.msra.mxu0 0.0
    %218 = vmatprep.subr.mxu0 0.0
    %219 = vmatpush1.msra.mxu0 0.0
    %220 = vmatprep.subr.mxu0 0.0
    %221 = vmatpush1.msra.mxu0 0.0
    %222 = vmatprep.subr.mxu0 0.0
    %223 = vmatpush1.msra.mxu0 0.0
    %224 = vmatprep.subr.mxu0 0.0
    %225 = vmatpush1.msra.mxu0 0.0
    %226 = vmatprep.mubr.f32.mxu0 0.0
    %227 = vmatmul.mubr.f32.gmra.mrb[0].mxu0 %v138
    %v228 = vpop.f32.mrb[0].mxu0
    %v229 = vadd.f32 %v161, %v228
    %v230 = vpop.f32.mrb[0].mxu0
    %231 = vmatprep.mubr.f32.mxu0 0.0
    %232 = vmatmul.mubr.f32.gmra.mrb[0].mxu0 %v139
    %v233 = vpop.f32.mrb[0].mxu0
    %v234 = vadd.f32 %v161, %v233
    %v235 = vpop.f32.mrb[0].mxu0
    %236 = vmatprep.mubr.f32.mxu0 0.0
    %237 = vmatmul.mubr.f32.gmra.mrb[0].mxu0 %v140
    %v238 = vpop.f32.mrb[0].mxu0
    %v239 = vadd.f32 %v161, %v238
    %v240 = vpop.f32.mrb[0].mxu0
    %241 = vmatprep.mubr.f32.mxu0 0.0
    %242 = vmatmul.mubr.f32.gmra.mrb[0].mxu0 %v141
    %v243 = vpop.f32.mrb[0].mxu0
    %v244 = vadd.f32 %v161, %v243
    %v245 = vpop.f32.mrb[0].mxu0
    %246 = vdwg.mxu0
    %v247 = vmax.f32 %v229, 0.0
    %v248 = vmax.f32 %v234, 0.0
    %v249 = vmax.f32 %v239, 0.0
    %v250 = vmax.f32 %v244, 0.0
    %v251 = vld [vmem:[%s3] sm:$0xff]
    %v252 = vld [vmem:[%s3 + $0x8] sm:$0xff]
    %v253 = vld [vmem:[%s3 + $0x10] sm:$0xff]
    %v254 = vld [vmem:[%s3 + $0x18] sm:$0xff]
    %v255 = vld [vmem:[%s3 + $0x20] sm:$0xff]
    %v256 = vld [vmem:[%s3 + $0x28] sm:$0xff]
    %v257 = vld [vmem:[%s3 + $0x30] sm:$0xff]
    %v258 = vld [vmem:[%s3 + $0x38] sm:$0xff]
    %v259 = vld [vmem:[%s3 + $0x40] sm:$0xff]
    %v260 = vld [vmem:[%s3 + $0x48] sm:$0xff]
    %v261 = vld [vmem:[%s3 + $0x50] sm:$0xff]
    %v262 = vld [vmem:[%s3 + $0x58] sm:$0xff]
    %v263 = vld [vmem:[%s3 + $0x60] sm:$0xff]
    %v264 = vld [vmem:[%s3 + $0x68] sm:$0xff]
    %v265 = vld [vmem:[%s3 + $0x70] sm:$0xff]
    %v266 = vld [vmem:[%s3 + $0x78] sm:$0xff]
    %v267 = vld [vmem:[%s3 + $0x80] sm:$0xff]
    %v268 = vld [vmem:[%s3 + $0x88] sm:$0xff]
    %v269 = vld [vmem:[%s3 + $0x90] sm:$0xff]
    %v270 = vld [vmem:[%s3 + $0x98] sm:$0xff]
    %v271 = vld [vmem:[%s3 + $0xa0] sm:$0xff]
    %v272 = vld [vmem:[%s3 + $0xa8] sm:$0xff]
    %v273 = vld [vmem:[%s3 + $0xb0] sm:$0xff]
    %v274 = vld [vmem:[%s3 + $0xb8] sm:$0xff]
    %v275 = vld [vmem:[%s3 + $0xc0] sm:$0xff]
    %v276 = vld [vmem:[%s3 + $0xc8] sm:$0xff]
    %v277 = vld [vmem:[%s3 + $0xd0] sm:$0xff]
    %v278 = vld [vmem:[%s3 + $0xd8] sm:$0xff]
    %v279 = vld [vmem:[%s3 + $0xe0] sm:$0xff]
    %v280 = vld [vmem:[%s3 + $0xe8] sm:$0xff]
    %v281 = vld [vmem:[%s3 + $0xf0] sm:$0xff]
    %v282 = vld [vmem:[%s3 + $0xf8] sm:$0xff]
    %283 = vmatprep.subr.mxu0 0.0
    %284 = vmatpush1.msra.mxu0 %v267
    %285 = vmatprep.subr.mxu0 0.0
    %286 = vmatpush1.msra.mxu0 %v268
    %287 = vmatprep.subr.mxu0 0.0
    %288 = vmatpush1.msra.mxu0 %v269
    %289 = vmatprep.subr.mxu0 0.0
    %290 = vmatpush1.msra.mxu0 %v270
    %291 = vmatprep.subr.mxu0 0.0
    %292 = vmatpush1.msra.mxu0 %v271
    %293 = vmatprep.subr.mxu0 0.0
    %294 = vmatpush1.msra.mxu0 %v272
    %295 = vmatprep.subr.mxu0 0.0
    %296 = vmatpush1.msra.mxu0 %v273
    %297 = vmatprep.subr.mxu0 0.0
    %298 = vmatpush1.msra.mxu0 %v274
    %299 = vmatprep.subr.mxu0 0.0
    %300 = vmatpush1.msra.mxu0 %v275
    %301 = vmatprep.subr.mxu0 0.0
    %302 = vmatpush1.msra.mxu0 %v276
    %303 = vmatprep.subr.mxu0 0.0
    %304 = vmatpush1.msra.mxu0 %v277
    %305 = vmatprep.subr.mxu0 0.0
    %306 = vmatpush1.msra.mxu0 %v278
    %307 = vmatprep.subr.mxu0 0.0
    %308 = vmatpush1.msra.mxu0 %v279
    %309 = vmatprep.subr.mxu0 0.0
    %310 = vmatpush1.msra.mxu0 %v280
    %311 = vmatprep.subr.mxu0 0.0
    %312 = vmatpush1.msra.mxu0 %v281
    %313 = vmatprep.subr.mxu0 0.0
    %314 = vmatpush1.msra.mxu0 %v282
    %315 = vmatprep.subr.mxu0 0.0
    %316 = vmatpush1.msra.mxu0 0.0
    %317 = vmatprep.subr.mxu0 0.0
    %318 = vmatpush1.msra.mxu0 0.0
    %319 = vmatprep.subr.mxu0 0.0
    %320 = vmatpush1.msra.mxu0 0.0
    %321 = vmatprep.subr.mxu0 0.0
    %322 = vmatpush1.msra.mxu0 0.0
    %323 = vmatprep.subr.mxu0 0.0
    %324 = vmatpush1.msra.mxu0 0.0
    %325 = vmatprep.subr.mxu0 0.0
    %326 = vmatpush1.msra.mxu0 0.0
    %327 = vmatprep.subr.mxu0 0.0
    %328 = vmatpush1.msra.mxu0 0.0
    %329 = vmatprep.subr.mxu0 0.0
    %330 = vmatpush1.msra.mxu0 0.0
    %331 = vmatprep.subr.mxu0 0.0
    %332 = vmatpush1.msra.mxu0 0.0
    %333 = vmatprep.subr.mxu0 0.0
    %334 = vmatpush1.msra.mxu0 0.0
    %335 = vmatprep.subr.mxu0 0.0
    %336 = vmatpush1.msra.mxu0 0.0
    %337 = vmatprep.subr.mxu0 0.0
    %338 = vmatpush1.msra.mxu0 0.0
    %339 = vmatprep.subr.mxu0 0.0
    %340 = vmatpush1.msra.mxu0 0.0
    %341 = vmatprep.subr.mxu0 0.0
    %342 = vmatpush1.msra.mxu0 0.0
    %343 = vmatprep.subr.mxu0 0.0
    %344 = vmatpush1.msra.mxu0 0.0
    %345 = vmatprep.subr.mxu0 0.0
    %346 = vmatpush1.msra.mxu0 0.0
    %347 = vmatprep.mubr.f32.mxu0 0.0
    %348 = vmatmul.mubr.f32.gmra.mrb[0].mxu0 %v249
    %v349 = vpop.f32.mrb[0].mxu0
    %v350 = vadd.f32 0.0, %v349
    %v351 = vpop.f32.mrb[0].mxu0
    %352 = vmatprep.mubr.f32.mxu0 0.0
    %353 = vmatmul.mubr.f32.gmra.mrb[0].mxu0 %v250
    %v354 = vpop.f32.mrb[0].mxu0
    %v355 = vadd.f32 0.0, %v354
    %v356 = vpop.f32.mrb[0].mxu0
    %357 = vdwg.mxu0
    %358 = vmatprep.subr.mxu0 0.0
    %359 = vmatpush1.msra.mxu0 %v251
    %360 = vmatprep.subr.mxu0 0.0
    %361 = vmatpush1.msra.mxu0 %v252
    %362 = vmatprep.subr.mxu0 0.0
    %363 = vmatpush1.msra.mxu0 %v253
    %364 = vmatprep.subr.mxu0 0.0
    %365 = vmatpush1.msra.mxu0 %v254
    %366 = vmatprep.subr.mxu0 0.0
    %367 = vmatpush1.msra.mxu0 %v255
    %368 = vmatprep.subr.mxu0 0.0
    %369 = vmatpush1.msra.mxu0 %v256
    %370 = vmatprep.subr.mxu0 0.0
    %371 = vmatpush1.msra.mxu0 %v257
    %372 = vmatprep.subr.mxu0 0.0
    %373 = vmatpush1.msra.mxu0 %v258
    %374 = vmatprep.subr.mxu0 0.0
    %375 = vmatpush1.msra.mxu0 %v259
    %376 = vmatprep.subr.mxu0 0.0
    %377 = vmatpush1.msra.mxu0 %v260
    %378 = vmatprep.subr.mxu0 0.0
    %379 = vmatpush1.msra.mxu0 %v261
    %380 = vmatprep.subr.mxu0 0.0
    %381 = vmatpush1.msra.mxu0 %v262
    %382 = vmatprep.subr.mxu0 0.0
    %383 = vmatpush1.msra.mxu0 %v263
    %384 = vmatprep.subr.mxu0 0.0
    %385 = vmatpush1.msra.mxu0 %v264
    %386 = vmatprep.subr.mxu0 0.0
    %387 = vmatpush1.msra.mxu0 %v265
    %388 = vmatprep.subr.mxu0 0.0
    %389 = vmatpush1.msra.mxu0 %v266
    %390 = vmatprep.subr.mxu0 0.0
    %391 = vmatpush1.msra.mxu0 0.0
    %392 = vmatprep.subr.mxu0 0.0
    %393 = vmatpush1.msra.mxu0 0.0
    %394 = vmatprep.subr.mxu0 0.0
    %395 = vmatpush1.msra.mxu0 0.0
    %396 = vmatprep.subr.mxu0 0.0
    %397 = vmatpush1.msra.mxu0 0.0
    %398 = vmatprep.subr.mxu0 0.0
    %399 = vmatpush1.msra.mxu0 0.0
    %400 = vmatprep.subr.mxu0 0.0
    %401 = vmatpush1.msra.mxu0 0.0
    %402 = vmatprep.subr.mxu0 0.0
    %403 = vmatpush1.msra.mxu0 0.0
    %404 = vmatprep.subr.mxu0 0.0
    %405 = vmatpush1.msra.mxu0 0.0
    %406 = vmatprep.subr.mxu0 0.0
    %407 = vmatpush1.msra.mxu0 0.0
    %408 = vmatprep.subr.mxu0 0.0
    %409 = vmatpush1.msra.mxu0 0.0
    %410 = vmatprep.subr.mxu0 0.0
    %411 = vmatpush1.msra.mxu0 0.0
    %412 = vmatprep.subr.mxu0 0.0
    %413 = vmatpush1.msra.mxu0 0.0
    %414 = vmatprep.subr.mxu0 0.0
    %415 = vmatpush1.msra.mxu0 0.0
    %416 = vmatprep.subr.mxu0 0.0
    %417 = vmatpush1.msra.mxu0 0.0
    %418 = vmatprep.subr.mxu0 0.0
    %419 = vmatpush1.msra.mxu0 0.0
    %420 = vmatprep.subr.mxu0 0.0
    %421 = vmatpush1.msra.mxu0 0.0
    %422 = vmatprep.mubr.f32.mxu0 0.0
    %423 = vmatmul.mubr.f32.gmra.mrb[0].mxu0 %v247
    %v424 = vpop.f32.mrb[0].mxu0
    %v425 = vadd.f32 %v350, %v424
    %v426 = vpop.f32.mrb[0].mxu0
    %427 = vmatprep.mubr.f32.mxu0 0.0
    %428 = vmatmul.mubr.f32.gmra.mrb[0].mxu0 %v248
    %v429 = vpop.f32.mrb[0].mxu0
    %v430 = vadd.f32 %v355, %v429
    %v431 = vpop.f32.mrb[0].mxu0
    %432 = vdwg.mxu0
    %v433 = vlaneseq
    %v434 = vshrl.u32 %v433, 7
    %v435 = vsub.s32 0, %v434
    %v436 = vrot.slane %v26, %v435
    %v437 = vadd.f32 %v425, %v436
    %v438 = vadd.f32 %v430, %v436
    %v439 = vmax.f32 %v437, 0.0
    %v440 = vmax.f32 %v438, 0.0
    %v441 = vld [vmem:[%s4] sm:$0xff]
    %v442 = vld [vmem:[%s4 + $0x8] sm:$0xff]
    %v443 = vld [vmem:[%s4 + $0x10] sm:$0xff]
    %v444 = vld [vmem:[%s4 + $0x18] sm:$0xff]
    %v445 = vld [vmem:[%s4 + $0x20] sm:$0xff]
    %v446 = vld [vmem:[%s4 + $0x28] sm:$0xff]
    %v447 = vld [vmem:[%s4 + $0x30] sm:$0xff]
    %v448 = vld [vmem:[%s4 + $0x38] sm:$0xff]
    %v449 = vld [vmem:[%s4 + $0x40] sm:$0xff]
    %v450 = vld [vmem:[%s4 + $0x48] sm:$0xff]
    %v451 = vld [vmem:[%s4 + $0x50] sm:$0xff]
    %v452 = vld [vmem:[%s4 + $0x58] sm:$0xff]
    %v453 = vld [vmem:[%s4 + $0x60] sm:$0xff]
    %v454 = vld [vmem:[%s4 + $0x68] sm:$0xff]
    %v455 = vld [vmem:[%s4 + $0x70] sm:$0xff]
    %v456 = vld [vmem:[%s4 + $0x78] sm:$0xff]
    %v457 = vlaneseq
    %v458 = vshrl.u32 %v457, 7
    %v459 = vsub.s32 0, %v458
    %v460 = vrot.slane %v27, %v459
    %461 = vmatprep.subr.mxu0 0.0
    %462 = vmatpush1.msra.mxu0 %v441
    %463 = vmatprep.subr.mxu0 0.0
    %464 = vmatpush1.msra.mxu0 %v442
    %465 = vmatprep.subr.mxu0 0.0
    %466 = vmatpush1.msra.mxu0 %v443
    %467 = vmatprep.subr.mxu0 0.0
    %468 = vmatpush1.msra.mxu0 %v444
    %469 = vmatprep.subr.mxu0 0.0
    %470 = vmatpush1.msra.mxu0 %v445
    %471 = vmatprep.subr.mxu0 0.0
    %472 = vmatpush1.msra.mxu0 %v446
    %473 = vmatprep.subr.mxu0 0.0
    %474 = vmatpush1.msra.mxu0 %v447
    %475 = vmatprep.subr.mxu0 0.0
    %476 = vmatpush1.msra.mxu0 %v448
    %477 = vmatprep.subr.mxu0 0.0
    %478 = vmatpush1.msra.mxu0 %v449
    %479 = vmatprep.subr.mxu0 0.0
    %480 = vmatpush1.msra.mxu0 %v450
    %481 = vmatprep.subr.mxu0 0.0
    %482 = vmatpush1.msra.mxu0 %v451
    %483 = vmatprep.subr.mxu0 0.0
    %484 = vmatpush1.msra.mxu0 %v452
    %485 = vmatprep.subr.mxu0 0.0
    %486 = vmatpush1.msra.mxu0 %v453
    %487 = vmatprep.subr.mxu0 0.0
    %488 = vmatpush1.msra.mxu0 %v454
    %489 = vmatprep.subr.mxu0 0.0
    %490 = vmatpush1.msra.mxu0 %v455
    %491 = vmatprep.subr.mxu0 0.0
    %492 = vmatpush1.msra.mxu0 %v456
    %493 = vmatprep.subr.mxu0 0.0
    %494 = vmatpush1.msra.mxu0 0.0
    %495 = vmatprep.subr.mxu0 0.0
    %496 = vmatpush1.msra.mxu0 0.0
    %497 = vmatprep.subr.mxu0 0.0
    %498 = vmatpush1.msra.mxu0 0.0
    %499 = vmatprep.subr.mxu0 0.0
    %500 = vmatpush1.msra.mxu0 0.0
    %501 = vmatprep.subr.mxu0 0.0
    %502 = vmatpush1.msra.mxu0 0.0
    %503 = vmatprep.subr.mxu0 0.0
    %504 = vmatpush1.msra.mxu0 0.0
    %505 = vmatprep.subr.mxu0 0.0
    %506 = vmatpush1.msra.mxu0 0.0
    %507 = vmatprep.subr.mxu0 0.0
    %508 = vmatpush1.msra.mxu0 0.0
    %509 = vmatprep.subr.mxu0 0.0
    %510 = vmatpush1.msra.mxu0 0.0
    %511 = vmatprep.subr.mxu0 0.0
    %512 = vmatpush1.msra.mxu0 0.0
    %513 = vmatprep.subr.mxu0 0.0
    %514 = vmatpush1.msra.mxu0 0.0
    %515 = vmatprep.subr.mxu0 0.0
    %516 = vmatpush1.msra.mxu0 0.0
    %517 = vmatprep.subr.mxu0 0.0
    %518 = vmatpush1.msra.mxu0 0.0
    %519 = vmatprep.subr.mxu0 0.0
    %520 = vmatpush1.msra.mxu0 0.0
    %521 = vmatprep.subr.mxu0 0.0
    %522 = vmatpush1.msra.mxu0 0.0
    %523 = vmatprep.subr.mxu0 0.0
    %524 = vmatpush1.msra.mxu0 0.0
    %525 = vmatprep.mubr.f32.mxu0 0.0
    %526 = vmatmul.mubr.f32.gmra.mrb[0].mxu0 %v439
    %v527 = vpop.f32.mrb[0].mxu0
    %v528 = vadd.f32 %v460, %v527
    %v529 = vpop.f32.mrb[0].mxu0
    %530 = vmatprep.mubr.f32.mxu0 0.0
    %531 = vmatmul.mubr.f32.gmra.mrb[0].mxu0 %v440
    %v532 = vpop.f32.mrb[0].mxu0
    %v533 = vadd.f32 %v460, %v532
    %v534 = vpop.f32.mrb[0].mxu0
    %535 = vdwg.mxu0
    %v536 = vxor.u32 %v528, 2147483648
    %v537 = vxor.u32 %v533, 2147483648
    %v538 = vmul.f32 %v536, 1.442695
    %v539 = vpow.pop %v538
    %v540 = vmul.f32 %v537, 1.442695
    %v541 = vpow.pop %v540
    %v542 = vadd.f32 %v539, 1.0
    %v543 = vadd.f32 %v541, 1.0
    %v544 = vrcp.pop %v542
    %v545 = vmul.f32 1.0, %v544
    %v546 = vrcp.pop %v543
    %v547 = vmul.f32 1.0, %v546
    %vm548 = vcmask 130048
    %549 = vst.msk [vmem:[#allocation2] sm:$0xff] %vm548, %v545
    %550 = vst.msk [vmem:[#allocation2 + $0x8] sm:$0xff] %vm548, %v547
    // Predicated region
    $region26: #{bmnddi_forward.1} parent=1 // pred_check
      _
    $region27: #{bmnddi_forward.1} parent=1 // pred_check_branch
      %552 = sbr.rel (0) target = $region29
    $region28: #{bmnddi_forward.1} parent=1 // pred_region
      %s554 = ssub.s32 256, 256
      %555 = vsyncadd [#allocation3], %s554
      %s556 = sshll.u32 [#allocation2], 4
      %s557 = int_to_ptr.vmem [resolvable:$true] %s556
      %562 = dma.vmem_to_hbm [thread:$0]  %s557, 256, %s6, [#allocation3], 128, 128, 8
    $region29: #{bmnddi_forward.1} parent=1 // pred_fallthru
      _
    // Predicated region
    $region30: #{bmnddi_forward.1} parent=1 // pred_check
      _
    $region31: #{bmnddi_forward.1} parent=1 // pred_check_branch
      %564 = sbr.rel (0) target = $region33
    $region32: #{bmnddi_forward.1} parent=1 // pred_region
      %565 = dma.done [#allocation3], 256
    $region33: #{bmnddi_forward.1} parent=1 // pred_fallthru
      _
    %566 = vsyncpa [#allocation3], 1

</llo_original>
